<compile_context>
chip_gen: v6e
topology: v6e:2x2x1
jax: 0.10.0
libtpu: 0.0.40
codegen_flags: <defaults>
</compile_context>

<pallas_src>
import functools

import jax
import jax.numpy as jnp
from jax.experimental import pallas as pl
from jax.experimental.pallas import tpu as pltpu

_MIB = 1024 * 1024
_TARGET_BLOCK_BYTES = 4 * _MIB   # per-block DMA target (>=2 MiB ~ roofline)
_VMEM_CAP = 48 * _MIB            # stay under v7x's 64 MiB physical VMEM


def _round_up(x, m):
    return ((x + m - 1) // m) * m


def _round_down(x, m):
    return (x // m) * m


def _largest_divisor_at_most(n, cap):
    cap = max(1, min(n, cap))
    for d in range(cap, 0, -1):
        if n % d == 0:
            return d
    return 1


# ----------------------------- fused fast path ------------------------------

def _se_fused_kernel(x_ref, w1_ref, b1_ref, w2_ref, b2_ref, o_ref):
    # x block: (Bt, C, HWp), zero-padded along HWp.  1/HW folded into w1.
    x = x_ref[...]                                              # (Bt, C, HWp)

    # Squeeze: sum over spatial lanes (padding lanes are zero).
    pooled = jnp.sum(x, axis=-1)                                # (Bt, C)

    # Excitation: two tiny matmuls + bias + ReLU + sigmoid (negligible vs DMA).
    h = jnp.dot(pooled, w1_ref[...],
                preferred_element_type=jnp.float32) + b1_ref[...]   # (Bt, Ch)
    h = jnp.maximum(h, 0.0)
    g = jnp.dot(h, w2_ref[...],
                preferred_element_type=jnp.float32) + b2_ref[...]   # (Bt, C)
    g = jax.nn.sigmoid(g)

    # Scale: per-(batch, channel) gate broadcast over the spatial (lane) dim.
    o_ref[...] = (x * g[:, :, None]).astype(o_ref.dtype)


# ------------------------ tiled fallback (two passes) ------------------------

def _pool_gate_kernel(x_ref, w1_ref, b1_ref, w2_ref, b2_ref, g_ref, acc_ref):
    k = pl.program_id(1)

    @pl.when(k == 0)
    def _():
        acc_ref[...] = jnp.zeros_like(acc_ref)

    acc_ref[...] += jnp.sum(x_ref[...], axis=-1)                # (1, C)

    @pl.when(k == pl.num_programs(1) - 1)
    def _():
        pooled = acc_ref[...]                                   # (1, C), sum
        h = jnp.dot(pooled, w1_ref[...],
                    preferred_element_type=jnp.float32) + b1_ref[...]
        h = jnp.maximum(h, 0.0)
        g = jnp.dot(h, w2_ref[...],
                    preferred_element_type=jnp.float32) + b2_ref[...]
        g_ref[...] = jax.nn.sigmoid(g)[:, None, :]              # (1, 1, C)


def _scale_kernel(x_ref, g_ref, o_ref):
    # x: (1, C, HWt), g: (1, C, 1) -> broadcast over lanes, no in-kernel relayout.
    o_ref[...] = (x_ref[...] * g_ref[...]).astype(o_ref.dtype)


# --------------------------------- wrapper -----------------------------------

@functools.partial(jax.jit, static_argnames=("force_tiled", "hw_block"))
def se_forward(x_nchw, w1, b1, w2, b2, force_tiled=False, hw_block=None):
    """x_nchw: (B, C, H, W).
    Weights in PyTorch nn.Linear layout: w1 (C//r, C), b1 (C//r,),
    w2 (C, C//r), b2 (C,)."""
    B, C, H, W = x_nchw.shape
    HW = H * W
    Ch = w1.shape[0]
    itemsize = jnp.dtype(x_nchw.dtype).itemsize

    # One-time weight prep: transpose to (K, N) for y @ W and fold the 1/HW
    # average-pool normalization into the first weight matrix.
    w1t = (w1.T / float(HW)).astype(jnp.float32)   # (C, Ch)
    w2t = w2.T.astype(jnp.float32)                 # (Ch, C)
    b1r = b1.reshape(1, Ch).astype(jnp.float32)
    b2r = b2.reshape(1, C).astype(jnp.float32)
    weight_bytes = 4 * (2 * C * Ch + C + Ch)

    x = x_nchw.reshape(B, C, HW)

    # ------------------------- plan the fused path ---------------------------
    HWp_f = _round_up(HW, 128)
    per_image = C * HWp_f * itemsize
    Bt = _largest_divisor_at_most(B, max(1, _TARGET_BLOCK_BYTES // per_image))
    block_bytes = Bt * per_image
    fused_need = 4 * block_bytes + weight_bytes + 2 * _MIB  # in/out double-buffered
    use_fused = (not force_tiled) and (fused_need <= _VMEM_CAP)

    if use_fused:
        xk = x if HWp_f == HW else jnp.pad(x, ((0, 0), (0, 0), (0, HWp_f - HW)))
        out = pl.pallas_call(
            _se_fused_kernel,
            out_shape=jax.ShapeDtypeStruct((B, C, HWp_f), x.dtype),
            grid_spec=pltpu.PrefetchScalarGridSpec(
                num_scalar_prefetch=0,
                grid=(B // Bt,),
                in_specs=[
                    pl.BlockSpec((Bt, C, HWp_f), lambda i: (i, 0, 0)),
                    pl.BlockSpec((C, Ch), lambda i: (0, 0)),
                    pl.BlockSpec((1, Ch), lambda i: (0, 0)),
                    pl.BlockSpec((Ch, C), lambda i: (0, 0)),
                    pl.BlockSpec((1, C), lambda i: (0, 0)),
                ],
                out_specs=pl.BlockSpec((Bt, C, HWp_f), lambda i: (i, 0, 0)),
            ),
            compiler_params=pltpu.CompilerParams(
                dimension_semantics=("parallel",),
                vmem_limit_bytes=int(min(_VMEM_CAP, max(16 * _MIB, fused_need)))),
        )(xk, w1t, b1r, w2t, b2r)
        if HWp_f != HW:
            out = out[:, :, :HW]
        return out.reshape(B, C, H, W)

    # ---------------- tiled two-pass path (large feature maps) ---------------
    if hw_block is not None:
        HWt = _round_up(int(hw_block), 128)
    else:
        HWt = max(128, _round_down(_TARGET_BLOCK_BYTES // (C * itemsize), 128))
    HWt = min(HWt, _round_up(HW, 128))
    HWp = _round_up(HW, HWt)
    n_hw = HWp // HWt
    tile_bytes = C * HWt * itemsize

    xk = x if HWp == HW else jnp.pad(x, ((0, 0), (0, 0), (0, HWp - HW)))

    # Pass 1: pooled sum over HW tiles, then gate at the last tile.
    gate = pl.pallas_call(
        _pool_gate_kernel,
        out_shape=jax.ShapeDtypeStruct((B, 1, C), jnp.float32),
        grid_spec=pltpu.PrefetchScalarGridSpec(
            num_scalar_prefetch=0,
            grid=(B, n_hw),
            in_specs=[
                pl.BlockSpec((1, C, HWt), lambda i, k: (i, 0, k)),
                pl.BlockSpec((C, Ch), lambda i, k: (0, 0)),
                pl.BlockSpec((1, Ch), lambda i, k: (0, 0)),
                pl.BlockSpec((Ch, C), lambda i, k: (0, 0)),
                pl.BlockSpec((1, C), lambda i, k: (0, 0)),
            ],
            out_specs=pl.BlockSpec((1, 1, C), lambda i, k: (i, 0, 0)),
            scratch_shapes=[pltpu.VMEM((1, C), jnp.float32)],
        ),
        compiler_params=pltpu.CompilerParams(
            dimension_semantics=("parallel", "arbitrary"),
            vmem_limit_bytes=int(min(_VMEM_CAP,
                                     max(16 * _MIB,
                                         2 * tile_bytes + weight_bytes + 2 * _MIB)))),
    )(xk, w1t, b1r, w2t, b2r)

    # (B, 1, C) -> (B, C, 1): same row-major order, tiny relayout in XLA; lets
    # the scale kernel broadcast over lanes with no in-kernel transpose.
    gate = gate.reshape(B, C, 1)

    # Pass 2: apply the gate, lane-dense output stores.
    out = pl.pallas_call(
        _scale_kernel,
        out_shape=jax.ShapeDtypeStruct((B, C, HWp), x.dtype),
        grid_spec=pltpu.PrefetchScalarGridSpec(
            num_scalar_prefetch=0,
            grid=(B, n_hw),
            in_specs=[
                pl.BlockSpec((1, C, HWt), lambda i, k: (i, 0, k)),
                pl.BlockSpec((1, C, 1), lambda i, k: (i, 0, 0)),
            ],
            out_specs=pl.BlockSpec((1, C, HWt), lambda i, k: (i, 0, k)),
        ),
        compiler_params=pltpu.CompilerParams(
            dimension_semantics=("parallel", "parallel"),
            vmem_limit_bytes=int(min(_VMEM_CAP,
                                     max(16 * _MIB, 4 * tile_bytes + 2 * _MIB)))),
    )(xk, gate)

    if HWp != HW:
        out = out[:, :, :HW]
    return out.reshape(B, C, H, W)


def se_reference(x_nchw, w1, b1, w2, b2):
    # Pure-JAX reference matching the PyTorch forward exactly (incl. biases).
    y = jnp.mean(x_nchw, axis=(2, 3))                 # AdaptiveAvgPool2d(1)
    y = jnp.maximum(y @ w1.T + b1, 0.0)               # Linear(C, C//r) + ReLU
    y = jax.nn.sigmoid(y @ w2.T + b2)                 # Linear(C//r, C) + Sigmoid
    return x_nchw * y[:, :, None, None]


if __name__ == "__main__":
    # Small shapes consistent with the module: C divisible by ratio=16.
    B, C, H, W = 2, 32, 16, 16
    ratio = 16
    Ch = C // ratio  # hidden = 2

    key = jax.random.PRNGKey(0)
    kx, k1, kb1, k2, kb2 = jax.random.split(key, 5)

    x = jax.random.normal(kx, (B, C, H, W), dtype=jnp.float32)
    # PyTorch nn.Linear layouts: weight (out, in), bias (out,)
    w1 = jax.random.normal(k1, (Ch, C), dtype=jnp.float32) * (1.0 / jnp.sqrt(C))
    b1 = jax.random.normal(kb1, (Ch,), dtype=jnp.float32) * 0.1
    w2 = jax.random.normal(k2, (C, Ch), dtype=jnp.float32) * (1.0 / jnp.sqrt(Ch))
    b2 = jax.random.normal(kb2, (C,), dtype=jnp.float32) * 0.1

    ref = se_reference(x, w1, b1, w2, b2)

    # Fast fused path.
    out_fused = jax.block_until_ready(se_forward(x, w1, b1, w2, b2))
    assert out_fused.shape == (B, C, H, W)
    assert jnp.allclose(out_fused, ref, atol=1e-5, rtol=1e-5), "fused path mismatch"

    # Exercise the HW-tiled fallback path (used for large feature maps).
    out_tiled = jax.block_until_ready(
        se_forward(x, w1, b1, w2, b2, force_tiled=True, hw_block=128))
    assert out_tiled.shape == (B, C, H, W)
    assert jnp.allclose(out_tiled, ref, atol=1e-5, rtol=1e-5), "tiled path mismatch"

    print("KERNEL_OK")
</pallas_src>

<mosaic_0001>
module attributes {stable_mosaic.version = 11 : i64} {
  func.func @_se_fused_kernel(%arg0: i32, %arg1: memref<2x32x256xf32, #tpu.memory_space<vmem>>, %arg2: memref<32x2xf32, #tpu.memory_space<vmem>>, %arg3: memref<1x2xf32, #tpu.memory_space<vmem>>, %arg4: memref<2x32xf32, #tpu.memory_space<vmem>>, %arg5: memref<1x32xf32, #tpu.memory_space<vmem>>, %arg6: memref<2x32x256xf32, #tpu.memory_space<vmem>>) attributes {dimension_semantics = [#tpu.dimension_semantics<parallel>], iteration_bounds = array<i64: 1>, scalar_prefetch = 0 : i64, scratch_operands = 0 : i64, tpu.core_type = #tpu.core_type<tc>, window_params = [{transform_indices = @transform_0, window_bounds = array<i64: 2, 32, 256>}, {pipeline_mode = #tpu.pipeline_mode<synchronous>, transform_indices = @transform_1, window_bounds = array<i64: 32, 2>}, {pipeline_mode = #tpu.pipeline_mode<synchronous>, transform_indices = @transform_2, window_bounds = array<i64: 1, 2>}, {pipeline_mode = #tpu.pipeline_mode<synchronous>, transform_indices = @transform_3, window_bounds = array<i64: 2, 32>}, {pipeline_mode = #tpu.pipeline_mode<synchronous>, transform_indices = @transform_4, window_bounds = array<i64: 1, 32>}, {transform_indices = @transform_5, window_bounds = array<i64: 2, 32, 256>}]} {
    %c0 = arith.constant 0 : index
    %c0_0 = arith.constant 0 : index
    %c0_1 = arith.constant 0 : index
    %0 = vector.load %arg1[%c0, %c0_0, %c0_1] : memref<2x32x256xf32, #tpu.memory_space<vmem>>, vector<2x32x256xf32>
    %cst = arith.constant dense<0.000000e+00> : vector<2x32xf32>
    %1 = vector.multi_reduction <add>, %0, %cst [2] : vector<2x32x256xf32> to vector<2x32xf32>
    %c0_2 = arith.constant 0 : index
    %c0_3 = arith.constant 0 : index
    %2 = vector.load %arg2[%c0_2, %c0_3] : memref<32x2xf32, #tpu.memory_space<vmem>>, vector<32x2xf32>
    %cst_4 = arith.constant dense<0.000000e+00> : vector<2x2xf32>
    %3 = tpu.matmul %1, %2, %cst_4 {dimension_numbers = #tpu.dot_dimension_numbers<[1], [0], [0], [1], [0, 0, 1, 1], [], []>} : vector<2x32xf32>, vector<32x2xf32>, vector<2x2xf32> -> vector<2x2xf32>
    %c0_5 = arith.constant 0 : index
    %c0_6 = arith.constant 0 : index
    %4 = vector.load %arg3[%c0_5, %c0_6] : memref<1x2xf32, #tpu.memory_space<vmem>>, vector<1x2xf32>
    %5 = vector.broadcast %4 : vector<1x2xf32> to vector<2x2xf32>
    %6 = arith.addf %3, %5 : vector<2x2xf32>
    %cst_7 = arith.constant 0.000000e+00 : f32
    %7 = vector.broadcast %cst_7 : f32 to vector<2x2xf32>
    %8 = arith.maximumf %6, %7 : vector<2x2xf32>
    %c0_8 = arith.constant 0 : index
    %c0_9 = arith.constant 0 : index
    %9 = vector.load %arg4[%c0_8, %c0_9] : memref<2x32xf32, #tpu.memory_space<vmem>>, vector<2x32xf32>
    %cst_10 = arith.constant dense<0.000000e+00> : vector<2x32xf32>
    %10 = tpu.matmul %8, %9, %cst_10 {dimension_numbers = #tpu.dot_dimension_numbers<[1], [0], [0], [1], [0, 0, 1, 1], [], []>} : vector<2x2xf32>, vector<2x32xf32>, vector<2x32xf32> -> vector<2x32xf32>
    %c0_11 = arith.constant 0 : index
    %c0_12 = arith.constant 0 : index
    %11 = vector.load %arg5[%c0_11, %c0_12] : memref<1x32xf32, #tpu.memory_space<vmem>>, vector<1x32xf32>
    %12 = vector.broadcast %11 : vector<1x32xf32> to vector<2x32xf32>
    %13 = arith.addf %10, %12 : vector<2x32xf32>
    %14 = arith.negf %13 : vector<2x32xf32>
    %15 = math.exp %14 : vector<2x32xf32>
    %cst_13 = arith.constant 1.000000e+00 : f32
    %16 = vector.broadcast %cst_13 : f32 to vector<2x32xf32>
    %17 = arith.addf %16, %15 : vector<2x32xf32>
    %18 = arith.divf %16, %17 : vector<2x32xf32>
    %19 = vector.shape_cast %18 : vector<2x32xf32> to vector<2x32x1xf32>
    %20 = vector.broadcast %19 : vector<2x32x1xf32> to vector<2x32x256xf32>
    %21 = arith.mulf %0, %20 : vector<2x32x256xf32>
    %c0_14 = arith.constant 0 : index
    %c0_15 = arith.constant 0 : index
    %c0_16 = arith.constant 0 : index
    %22 = vector.load %arg6[%c0_14, %c0_15, %c0_16] : memref<2x32x256xf32, #tpu.memory_space<vmem>>, vector<2x32x256xf32>
    tpu.vector_store %arg6[%c0_14, %c0_15, %c0_16], %21 {strides = array<i32>} : memref<2x32x256xf32, #tpu.memory_space<vmem>>, vector<2x32x256xf32>,
    return
  }
  func.func @transform_0(%arg0: i32) -> (i32, i32, i32) {
    %c0_i32 = arith.constant 0 : i32
    %c0_i32_0 = arith.constant 0 : i32
    %c0_i32_1 = arith.constant 0 : i32
    return %arg0, %c0_i32, %c0_i32_0 : i32, i32, i32
  }
  func.func @transform_1(%arg0: i32) -> (i32, i32) {
    %c0_i32 = arith.constant 0 : i32
    %c0_i32_0 = arith.constant 0 : i32
    %c0_i32_1 = arith.constant 0 : i32
    return %c0_i32, %c0_i32_0 : i32, i32
  }
  func.func @transform_2(%arg0: i32) -> (i32, i32) {
    %c0_i32 = arith.constant 0 : i32
    %c0_i32_0 = arith.constant 0 : i32
    %c0_i32_1 = arith.constant 0 : i32
    return %c0_i32, %c0_i32_0 : i32, i32
  }
  func.func @transform_3(%arg0: i32) -> (i32, i32) {
    %c0_i32 = arith.constant 0 : i32
    %c0_i32_0 = arith.constant 0 : i32
    %c0_i32_1 = arith.constant 0 : i32
    return %c0_i32, %c0_i32_0 : i32, i32
  }
  func.func @transform_4(%arg0: i32) -> (i32, i32) {
    %c0_i32 = arith.constant 0 : i32
    %c0_i32_0 = arith.constant 0 : i32
    %c0_i32_1 = arith.constant 0 : i32
    return %c0_i32, %c0_i32_0 : i32, i32
  }
  func.func @transform_5(%arg0: i32) -> (i32, i32, i32) {
    %c0_i32 = arith.constant 0 : i32
    %c0_i32_0 = arith.constant 0 : i32
    %c0_i32_1 = arith.constant 0 : i32
    return %arg0, %c0_i32, %c0_i32_0 : i32, i32, i32
  }
}

</mosaic_0001>

<llo_original>
// kernel: se_forward.1
$region0: #{se_forward.1}
  #allocation0 [shape = 'u32[]', space=smem, size = 0x4, offset = 0x4, fixed_abs, tag = 'smem constant byte address 0x4 - core index']
  #allocation1 [shape = 'u32[144,128]{1,0:T(1,128)}', space=vmem, size = 0x12000, scoped, tag = 'internal scratch']
  %s0 = inlined_call_operand.vmem [shape: f32[2,32,256], index: 0, kind: input, shape index: {}]
  %s1 = inlined_call_operand.vmem [shape: f32[32,2], index: 1, kind: input, shape index: {}]
  %s2 = inlined_call_operand.vmem [shape: f32[1,2], index: 2, kind: input, shape index: {}]
  %s3 = inlined_call_operand.vmem [shape: f32[2,32], index: 3, kind: input, shape index: {}]
  %s4 = inlined_call_operand.vmem [shape: f32[1,32], index: 4, kind: input, shape index: {}]
  %s5 = inlined_call_operand.vmem [shape: f32[2,32,256], index: 5, kind: output, shape index: {}]
  %s6 = sld [smem:[#allocation0]]
  $region30: #{se_forward.1} parent=0
    _
  %s8 = ssub.s32 1, %s6
  %s9 = scalar_select 0, %s8, %s6
  // Predicated region
  $region2: #{se_forward.1} parent=0 // pred_check
    _
  $region3: #{se_forward.1} parent=0 // pred_check_branch
    %11 = sbr.rel (0) target = $region5
  $region4: #{se_forward.1} parent=0 // pred_region
    _
  $region5: #{se_forward.1} parent=0 // pred_fallthru
    _
  // Predicated region
  $region6: #{se_forward.1} parent=0 // pred_check
    _
  $region7: #{se_forward.1} parent=0 // pred_check_branch
    %13 = sbr.rel (0) target = $region9
  $region8: #{se_forward.1} parent=0 // pred_region
    _
  $region9: #{se_forward.1} parent=0 // pred_fallthru
    _
  // Predicated region
  $region10: #{se_forward.1} parent=0 // pred_check
    _
  $region11: #{se_forward.1} parent=0 // pred_check_branch
    %15 = sbr.rel (0) target = $region13
  $region12: #{se_forward.1} parent=0 // pred_region
    _
  $region13: #{se_forward.1} parent=0 // pred_fallthru
    _
  // Predicated region
  $region14: #{se_forward.1} parent=0 // pred_check
    _
  $region15: #{se_forward.1} parent=0 // pred_check_branch
    %17 = sbr.rel (0) target = $region17
  $region16: #{se_forward.1} parent=0 // pred_region
    _
  $region17: #{se_forward.1} parent=0 // pred_fallthru
    _
  // Predicated region
  $region18: #{se_forward.1} parent=0 // pred_check
    _
  $region19: #{se_forward.1} parent=0 // pred_check_branch
    %19 = sbr.rel (0) target = $region21
  $region20: #{se_forward.1} parent=0 // pred_region
    _
  $region21: #{se_forward.1} parent=0 // pred_fallthru
    _
  %v20 = vld [vmem:[%s0] sm:$0xff]
  %v21 = vld [vmem:[%s0 + $0x8] sm:$0xff]
  %v22 = vld [vmem:[%s0 + $0x10] sm:$0xff]
  %v23 = vld [vmem:[%s0 + $0x18] sm:$0xff]
  %v24 = vld [vmem:[%s0 + $0x20] sm:$0xff]
  %v25 = vld [vmem:[%s0 + $0x28] sm:$0xff]
  %v26 = vld [vmem:[%s0 + $0x30] sm:$0xff]
  %v27 = vld [vmem:[%s0 + $0x38] sm:$0xff]
  %v28 = vld [vmem:[%s0 + $0x40] sm:$0xff]
  %v29 = vld [vmem:[%s0 + $0x48] sm:$0xff]
  %v30 = vld [vmem:[%s0 + $0x50] sm:$0xff]
  %v31 = vld [vmem:[%s0 + $0x58] sm:$0xff]
  %v32 = vld [vmem:[%s0 + $0x60] sm:$0xff]
  %v33 = vld [vmem:[%s0 + $0x68] sm:$0xff]
  %v34 = vld [vmem:[%s0 + $0x70] sm:$0xff]
  %v35 = vld [vmem:[%s0 + $0x78] sm:$0xff]
  %v36 = vadd.f32 %v20, %v21
  %37 = vadd.xlane.f32.xlu0 %v36
  %v38 = vpop.xlane.xlu0 %37
  %v39 = vadd.f32 %v22, %v23
  %40 = vadd.xlane.f32.xlu0 %v39
  %v41 = vpop.xlane.xlu0 %40
  %v42 = vadd.f32 %v24, %v25
  %43 = vadd.xlane.f32.xlu0 %v42
  %v44 = vpop.xlane.xlu0 %43
  %v45 = vadd.f32 %v26, %v27
  %46 = vadd.xlane.f32.xlu0 %v45
  %v47 = vpop.xlane.xlu0 %46
  %v48 = vadd.f32 %v28, %v29
  %49 = vadd.xlane.f32.xlu0 %v48
  %v50 = vpop.xlane.xlu0 %49
  %v51 = vadd.f32 %v30, %v31
  %52 = vadd.xlane.f32.xlu0 %v51
  %v53 = vpop.xlane.xlu0 %52
  %v54 = vadd.f32 %v32, %v33
  %55 = vadd.xlane.f32.xlu0 %v54
  %v56 = vpop.xlane.xlu0 %55
  %v57 = vadd.f32 %v34, %v35
  %58 = vadd.xlane.f32.xlu0 %v57
  %v59 = vpop.xlane.xlu0 %58
  %v60 = vld [vmem:[%s1] sm:$0xff]
  %v61 = vld [vmem:[%s1 + $0x8] sm:$0xff]
  %v62 = vld [vmem:[%s1 + $0x10] sm:$0xff]
  %v63 = vld [vmem:[%s1 + $0x18] sm:$0xff]
  %v64 = vld [vmem:[%s2] sm:$0x1]
  %v66 = vlaneseq
  %v67 = vshrl.u32 %v66, 7
  %v68 = vsub.s32 0, %v67
  %v69 = vrot.slane %v64, %v68
  %v79 = vlaneseq
  %v80 = vand.u32 %v79, 127
  %v81 = vlaneseq
  %v82 = vshrl.u32 %v81, 7
  %v83 = vsub.s32 %v80, %v82
  %v84 = vrot.slane %v38, %v83
  %v85 = vadd.s32 %v80, 4294967288
  %v86 = vlaneseq
  %v87 = vshrl.u32 %v86, 7
  %v88 = vsub.s32 %v85, %v87
  %v89 = vrot.slane %v41, %v88
  %vm90 = vcmask 130112
  %v91 = vsel %vm90, %v89, %v84
  %v92 = vadd.s32 %v80, 4294967280
  %v93 = vlaneseq
  %v94 = vshrl.u32 %v93, 7
  %v95 = vsub.s32 %v92, %v94
  %v96 = vrot.slane %v44, %v95
  %vm97 = vcmask 195712
  %v98 = vsel %vm97, %v96, %v91
  %v99 = vadd.s32 %v80, 4294967272
  %v100 = vlaneseq
  %v101 = vshrl.u32 %v100, 7
  %v102 = vsub.s32 %v99, %v101
  %v103 = vrot.slane %v47, %v102
  %vm104 = vcmask 261312
  %v105 = vsel %vm104, %v103, %v98
  %v106 = vlaneseq
  %v107 = vshrl.u32 %v106, 7
  %v108 = vsub.s32 %v80, %v107
  %v109 = vrot.slane %v50, %v108
  %v110 = vlaneseq
  %v111 = vshrl.u32 %v110, 7
  %v112 = vsub.s32 %v85, %v111
  %v113 = vrot.slane %v53, %v112
  %v114 = vsel %vm90, %v113, %v109
  %v115 = vlaneseq
  %v116 = vshrl.u32 %v115, 7
  %v117 = vsub.s32 %v92, %v116
  %v118 = vrot.slane %v56, %v117
  %v119 = vsel %vm97, %v118, %v114
  %v120 = vlaneseq
  %v121 = vshrl.u32 %v120, 7
  %v122 = vsub.s32 %v99, %v121
  %v123 = vrot.slane %v59, %v122
  %v124 = vsel %vm104, %v123, %v119
  %vm125 = vcmask 1041409
  %v126 = vsel %vm125, %v124, %v105
  %vm127 = vcmask 261120
  %v128 = vsel %vm127, %v126, 0
  %130 = vmatprep.subr.mxu0 0.0
  %131 = vmatpush1.msra.mxu0 0.0
  %132 = vmatprep.subr.mxu0 0.0
  %133 = vmatpush1.msra.mxu0 0.0
  %134 = vmatprep.subr.mxu0 0.0
  %135 = vmatpush1.msra.mxu0 0.0
  %136 = vmatprep.subr.mxu0 0.0
  %137 = vmatpush1.msra.mxu0 0.0
  %138 = vmatprep.subr.mxu0 0.0
  %139 = vmatpush1.msra.mxu0 0.0
  %140 = vmatprep.subr.mxu0 0.0
  %141 = vmatpush1.msra.mxu0 0.0
  %142 = vmatprep.subr.mxu0 0.0
  %143 = vmatpush1.msra.mxu0 0.0
  %144 = vmatprep.subr.mxu0 0.0
  %145 = vmatpush1.msra.mxu0 0.0
  %146 = vmatprep.subr.mxu0 0.0
  %147 = vmatpush1.msra.mxu0 0.0
  %148 = vmatprep.subr.mxu0 0.0
  %149 = vmatpush1.msra.mxu0 0.0
  %150 = vmatprep.subr.mxu0 0.0
  %151 = vmatpush1.msra.mxu0 0.0
  %152 = vmatprep.subr.mxu0 0.0
  %153 = vmatpush1.msra.mxu0 0.0
  %154 = vmatprep.subr.mxu0 0.0
  %155 = vmatpush1.msra.mxu0 %v63
  %156 = vmatprep.subr.mxu0 0.0
  %157 = vmatpush1.msra.mxu0 %v62
  %158 = vmatprep.subr.mxu0 0.0
  %159 = vmatpush1.msra.mxu0 %v61
  %160 = vmatprep.subr.mxu0 0.0
  %161 = vmatpush1.msra.mxu0 %v60
  %162 = vmatprep.subr.mxu0 0.0
  %163 = vmatpush2.msra.mxu0 0.0
  %164 = vmatprep.subr.mxu0 0.0
  %165 = vmatpush2.msra.mxu0 0.0
  %166 = vmatprep.subr.mxu0 0.0
  %167 = vmatpush2.msra.mxu0 0.0
  %168 = vmatprep.subr.mxu0 0.0
  %169 = vmatpush2.msra.mxu0 0.0
  %170 = vmatprep.subr.mxu0 0.0
  %171 = vmatpush2.msra.mxu0 0.0
  %172 = vmatprep.subr.mxu0 0.0
  %173 = vmatpush2.msra.mxu0 0.0
  %174 = vmatprep.subr.mxu0 0.0
  %175 = vmatpush2.msra.mxu0 0.0
  %176 = vmatprep.subr.mxu0 0.0
  %177 = vmatpush2.msra.mxu0 0.0
  %178 = vmatprep.subr.mxu0 0.0
  %179 = vmatpush2.msra.mxu0 0.0
  %180 = vmatprep.subr.mxu0 0.0
  %181 = vmatpush2.msra.mxu0 0.0
  %182 = vmatprep.subr.mxu0 0.0
  %183 = vmatpush2.msra.mxu0 0.0
  %184 = vmatprep.subr.mxu0 0.0
  %185 = vmatpush2.msra.mxu0 0.0
  %186 = vmatprep.subr.mxu0 0.0
  %187 = vmatpush2.msra.mxu0 0.0
  %188 = vmatprep.subr.mxu0 0.0
  %189 = vmatpush2.msra.mxu0 0.0
  %190 = vmatprep.subr.mxu0 0.0
  %191 = vmatpush2.msra.mxu0 0.0
  %192 = vmatprep.subr.mxu0 0.0
  %193 = vmatpush2.msra.mxu0 0.0
  %194 = vmatprep.mubr.f32.mxu0 0.0
  %195 = vmatmul.mubr.f32.gmra.mxu0 %v128
  %v196 = vpop.f32.mrf.mxu0
  %v197 = vadd.f32 %v69, %v196
  %v198 = vpop.f32.mrf.mxu0
  %199 = vdwg.mxu0
  %v200 = vmax.f32 %v197, 0.0
  %v201 = vld [vmem:[%s3] sm:$0x3]
  %v202 = vld [vmem:[%s4] sm:$0x1]
  %v204 = vlaneseq
  %v205 = vshrl.u32 %v204, 7
  %v206 = vsub.s32 0, %v205
  %v207 = vrot.slane %v202, %v206
  %vm209 = vcmask 15360
  %v211 = vsel %vm209, %v200, 0
  %vm213 = vcmask 1041408
  %v215 = vsel %vm213, %v201, 0
  %217 = vmatprep.subr.mxu0 0.0
  %218 = vmatpush1.msra.mxu0 0.0
  %219 = vmatprep.subr.mxu0 0.0
  %220 = vmatpush1.msra.mxu0 0.0
  %221 = vmatprep.subr.mxu0 0.0
  %222 = vmatpush1.msra.mxu0 0.0
  %223 = vmatprep.subr.mxu0 0.0
  %224 = vmatpush1.msra.mxu0 0.0
  %225 = vmatprep.subr.mxu0 0.0
  %226 = vmatpush1.msra.mxu0 0.0
  %227 = vmatprep.subr.mxu0 0.0
  %228 = vmatpush1.msra.mxu0 0.0
  %229 = vmatprep.subr.mxu0 0.0
  %230 = vmatpush1.msra.mxu0 0.0
  %231 = vmatprep.subr.mxu0 0.0
  %232 = vmatpush1.msra.mxu0 0.0
  %233 = vmatprep.subr.mxu0 0.0
  %234 = vmatpush1.msra.mxu0 0.0
  %235 = vmatprep.subr.mxu0 0.0
  %236 = vmatpush1.msra.mxu0 0.0
  %237 = vmatprep.subr.mxu0 0.0
  %238 = vmatpush1.msra.mxu0 0.0
  %239 = vmatprep.subr.mxu0 0.0
  %240 = vmatpush1.msra.mxu0 0.0
  %241 = vmatprep.subr.mxu0 0.0
  %242 = vmatpush1.msra.mxu0 0.0
  %243 = vmatprep.subr.mxu0 0.0
  %244 = vmatpush1.msra.mxu0 0.0
  %245 = vmatprep.subr.mxu0 0.0
  %246 = vmatpush1.msra.mxu0 0.0
  %247 = vmatprep.subr.mxu0 0.0
  %248 = vmatpush1.msra.mxu0 %v215
  %249 = vmatprep.subr.mxu0 0.0
  %250 = vmatpush2.msra.mxu0 0.0
  %251 = vmatprep.subr.mxu0 0.0
  %252 = vmatpush2.msra.mxu0 0.0
  %253 = vmatprep.subr.mxu0 0.0
  %254 = vmatpush2.msra.mxu0 0.0
  %255 = vmatprep.subr.mxu0 0.0
  %256 = vmatpush2.msra.mxu0 0.0
  %257 = vmatprep.subr.mxu0 0.0
  %258 = vmatpush2.msra.mxu0 0.0
  %259 = vmatprep.subr.mxu0 0.0
  %260 = vmatpush2.msra.mxu0 0.0
  %261 = vmatprep.subr.mxu0 0.0
  %262 = vmatpush2.msra.mxu0 0.0
  %263 = vmatprep.subr.mxu0 0.0
  %264 = vmatpush2.msra.mxu0 0.0
  %265 = vmatprep.subr.mxu0 0.0
  %266 = vmatpush2.msra.mxu0 0.0
  %267 = vmatprep.subr.mxu0 0.0
  %268 = vmatpush2.msra.mxu0 0.0
  %269 = vmatprep.subr.mxu0 0.0
  %270 = vmatpush2.msra.mxu0 0.0
  %271 = vmatprep.subr.mxu0 0.0
  %272 = vmatpush2.msra.mxu0 0.0
  %273 = vmatprep.subr.mxu0 0.0
  %274 = vmatpush2.msra.mxu0 0.0
  %275 = vmatprep.subr.mxu0 0.0
  %276 = vmatpush2.msra.mxu0 0.0
  %277 = vmatprep.subr.mxu0 0.0
  %278 = vmatpush2.msra.mxu0 0.0
  %279 = vmatprep.subr.mxu0 0.0
  %280 = vmatpush2.msra.mxu0 0.0
  %281 = vmatprep.mubr.f32.mxu0 0.0
  %282 = vmatmul.mubr.f32.gmra.mxu0 %v211
  %v283 = vpop.f32.mrf.mxu0
  %v284 = vadd.f32 %v207, %v283
  %v285 = vpop.f32.mrf.mxu0
  %286 = vdwg.mxu0
  %v287 = vxor.u32 %v284, 2147483648
  %v288 = vmul.f32 %v287, 1.442695
  %v289 = vpow.pop %v288
  %v290 = vadd.f32 %v289, 1.0
  %v291 = vrcp.pop %v290
  %v292 = vmul.f32 1.0, %v291
  %v293 = vlaneseq
  %v294 = vshrl.u32 %v293, 7
  %v295 = vsub.s32 0, %v294
  %v296 = vrot.slane %v292, %v295
  %298 = vbcast.lane.b32.xlu0 %v296, 256
  %v299 = vpop.permute.xlu0 %298
  %s301 = sor.u32 256, 8
  %302 = vbcast.lane.b32.xlu0 %v296, %s301
  %v303 = vpop.permute.xlu0 %302
  %s305 = sor.u32 256, 16
  %306 = vbcast.lane.b32.xlu0 %v296, %s305
  %v307 = vpop.permute.xlu0 %306
  %s309 = sor.u32 256, 24
  %310 = vbcast.lane.b32.xlu0 %v296, %s309
  %v311 = vpop.permute.xlu0 %310
  %v312 = vlaneseq
  %v313 = vshrl.u32 %v312, 7
  %v314 = vsub.s32 1, %v313
  %v315 = vrot.slane %v292, %v314
  %317 = vbcast.lane.b32.xlu0 %v315, 256
  %v318 = vpop.permute.xlu0 %317
  %s320 = sor.u32 256, 8
  %321 = vbcast.lane.b32.xlu0 %v315, %s320
  %v322 = vpop.permute.xlu0 %321
  %s324 = sor.u32 256, 16
  %325 = vbcast.lane.b32.xlu0 %v315, %s324
  %v326 = vpop.permute.xlu0 %325
  %s328 = sor.u32 256, 24
  %329 = vbcast.lane.b32.xlu0 %v315, %s328
  %v330 = vpop.permute.xlu0 %329
  %v331 = vmul.f32 %v20, %v299
  %v332 = vmul.f32 %v21, %v299
  %v333 = vmul.f32 %v22, %v303
  %v334 = vmul.f32 %v23, %v303
  %v335 = vmul.f32 %v24, %v307
  %v336 = vmul.f32 %v25, %v307
  %v337 = vmul.f32 %v26, %v311
  %v338 = vmul.f32 %v27, %v311
  %v339 = vmul.f32 %v28, %v318
  %v340 = vmul.f32 %v29, %v318
  %v341 = vmul.f32 %v30, %v322
  %v342 = vmul.f32 %v31, %v322
  %v343 = vmul.f32 %v32, %v326
  %v344 = vmul.f32 %v33, %v326
  %v345 = vmul.f32 %v34, %v330
  %v346 = vmul.f32 %v35, %v330
  %347 = vst [vmem:[%s5] sm:$0xff] %v331
  %348 = vst [vmem:[%s5 + $0x8] sm:$0xff] %v332
  %349 = vst [vmem:[%s5 + $0x10] sm:$0xff] %v333
  %350 = vst [vmem:[%s5 + $0x18] sm:$0xff] %v334
  %351 = vst [vmem:[%s5 + $0x20] sm:$0xff] %v335
  %352 = vst [vmem:[%s5 + $0x28] sm:$0xff] %v336
  %353 = vst [vmem:[%s5 + $0x30] sm:$0xff] %v337
  %354 = vst [vmem:[%s5 + $0x38] sm:$0xff] %v338
  %355 = vst [vmem:[%s5 + $0x40] sm:$0xff] %v339
  %356 = vst [vmem:[%s5 + $0x48] sm:$0xff] %v340
  %357 = vst [vmem:[%s5 + $0x50] sm:$0xff] %v341
  %358 = vst [vmem:[%s5 + $0x58] sm:$0xff] %v342
  %359 = vst [vmem:[%s5 + $0x60] sm:$0xff] %v343
  %360 = vst [vmem:[%s5 + $0x68] sm:$0xff] %v344
  %361 = vst [vmem:[%s5 + $0x70] sm:$0xff] %v345
  %362 = vst [vmem:[%s5 + $0x78] sm:$0xff] %v346
  // Predicated region
  $region22: #{se_forward.1} parent=0 // pred_check
    _
  $region23: #{se_forward.1} parent=0 // pred_check_branch
    %364 = sbr.rel (0) target = $region25
  $region24: #{se_forward.1} parent=0 // pred_region
    _
  $region25: #{se_forward.1} parent=0 // pred_fallthru
    _
  // Predicated region
  $region26: #{se_forward.1} parent=0 // pred_check
    _
  $region27: #{se_forward.1} parent=0 // pred_check_branch
    %366 = sbr.rel (0) target = $region29
  $region28: #{se_forward.1} parent=0 // pred_region
    _
  $region29: #{se_forward.1} parent=0 // pred_fallthru
    _

</llo_original>
